<compile_context>
chip_gen: v5e
topology: v5e:2x2
jax: 0.10.0
libtpu: 0.0.40
codegen_flags: <defaults>
</compile_context>

<pallas_src>
import functools

import jax
import jax.numpy as jnp
from jax.experimental import pallas as pl
from jax.experimental.pallas import tpu as pltpu


_MIN_BLOCK_BYTES = 1 << 20            # keep tiles >= ~1 MiB (per-grid-step overhead ~0.35 us)
_VMEM_SAFE_CAP = 56 * 1024 * 1024     # stay under v7x's 64 MiB per-TC physical VMEM


def _se_kernel(x_ref, w1t_ref, w2t_ref, o_ref, *, inv_len):
    # x_ref: (Bt, C, Lp)  native dtype
    # w1t_ref: (C, Cr) f32, w2t_ref: (Cr, C) f32   (pre-transposed PyTorch weights)
    x = x_ref[...]                                                   # (Bt, C, Lp)

    # Squeeze: global average pool over the (lane-dense, zero-padded) length
    # axis with f32 accumulation; divide by the true (unpadded) length.
    pooled = jnp.sum(x, axis=-1, dtype=jnp.float32) * inv_len        # (Bt, C) f32

    # Excitation: Linear -> ReLU -> Linear -> Sigmoid (bias-free), batched over
    # Bt.  Weights arrive pre-transposed and pre-cast, so these are plain
    # (M,K)x(K,N) MXU dots with no per-step converts.
    h = jnp.dot(pooled, w1t_ref[...], preferred_element_type=jnp.float32)   # (Bt, Cr)
    h = jnp.maximum(h, 0.0)
    s = jnp.dot(h, w2t_ref[...], preferred_element_type=jnp.float32)        # (Bt, C)
    gate = jax.nn.sigmoid(s)

    # Scale: broadcast the per-(item, channel) gate over the length axis.  The
    # big multiply stays in x's dtype (bf16 stays bf16 on v6e/v7x).
    o_ref[...] = (x * gate.astype(x.dtype)[:, :, None]).astype(o_ref.dtype)


def se_layer(x, w1, w2, *, target_block_bytes=4 * 1024 * 1024):
    """x: (B, C, L). w1: (C//r, C), w2: (C, C//r) -- PyTorch Linear weight layout."""
    B, C, L = x.shape
    Cr, C_in = w1.shape
    assert C_in == C and w2.shape == (C, Cr)

    # --- Lane-dense layout: pad L up to a multiple of 128 so every output row
    # is a full, unmasked vector store on the bandwidth-bound write path.
    Lp = ((L + 127) // 128) * 128
    x_in = jnp.pad(x, ((0, 0), (0, 0), (0, Lp - L))) if Lp != L else x

    # --- Pre-transpose + pre-cast the tiny weights once in the wrapper.
    w1t = w1.astype(jnp.float32).T                                    # (C, Cr)
    w2t = w2.astype(jnp.float32).T                                    # (Cr, C)

    itemsize = jnp.dtype(x.dtype).itemsize
    per_item_bytes = C * Lp * itemsize
    w_bytes = 2 * 4 * (w1t.size + w2t.size)            # (double-buffered) f32 weights

    # --- Guard: 2 in + 2 out buffers of even a single-item block must fit in VMEM.
    if 4 * per_item_bytes + w_bytes + (2 << 20) > _VMEM_SAFE_CAP:
        # TODO(synk): chunked-L manual-DMA pooling path for very large C*L feature maps.
        raise NotImplementedError(
            "single-item SE block exceeds the VMEM budget; needs a chunked-L path")

    # --- Batch-block size: aim for ~4 MiB tiles (HBM-roofline regime) ...
    bt = int(max(1, min(B, target_block_bytes // per_item_bytes)))
    # ... bounded so 2 in + 2 out double buffers + weights stay under the VMEM cap ...
    bt_vmem = max(1, int((_VMEM_SAFE_CAP - w_bytes - (2 << 20)) // (4 * per_item_bytes)))
    bt = min(bt, bt_vmem)
    # ... and shrink toward >= min(B, 4) grid steps (>= 2 per v7x TensorCore) so
    # DMA and compute overlap, but never below ~1 MiB tiles.  B == 1 (or tiny
    # total data) degenerates to a single unpipelined step, which is accepted.
    min_steps = min(B, 4)
    if pl.cdiv(B, bt) < min_steps:
        bt_steps = pl.cdiv(B, min_steps)                       # bt giving >= min_steps steps
        bt_floor = max(1, int(_MIN_BLOCK_BYTES // per_item_bytes))  # bt keeping >= ~1 MiB tiles
        bt = min(bt, max(bt_steps, bt_floor))
    grid = (pl.cdiv(B, bt),)

    # --- Explicit VMEM budget: floored at 32 MiB (v5e default scoped limit is
    # only 16 MiB), capped below v7x's 64 MiB physical VMEM.
    vmem_needed = 4 * bt * per_item_bytes + w_bytes + (2 << 20)
    vmem_limit = int(min(max(vmem_needed, 32 * 1024 * 1024), _VMEM_SAFE_CAP))

    cost = pl.CostEstimate(
        flops=4 * B * C * Cr + 2 * B * C * Lp,        # two tiny matmuls + pool + scale
        transcendentals=B * C,                         # sigmoid
        bytes_accessed=2 * B * C * Lp * itemsize + 4 * C * Cr * 4,
    )

    kernel = functools.partial(_se_kernel, inv_len=1.0 / L)

    out = pl.pallas_call(
        kernel,
        out_shape=jax.ShapeDtypeStruct((B, C, Lp), x.dtype),
        grid=grid,
        in_specs=[
            # If xprof ever shows exposed DMA at this tile size, sweep
            # pipeline_mode=pl.Buffered(3) here (budget the 3rd buffer into vmem_limit).
            pl.BlockSpec((bt, C, Lp), lambda b: (b, 0, 0)),
            pl.BlockSpec((C, Cr), lambda b: (0, 0)),
            pl.BlockSpec((Cr, C), lambda b: (0, 0)),
        ],
        out_specs=pl.BlockSpec((bt, C, Lp), lambda b: (b, 0, 0)),
        compiler_params=pltpu.CompilerParams(
            dimension_semantics=("parallel",),
            vmem_limit_bytes=vmem_limit,
        ),
        cost_estimate=cost,
    )(x_in, w1t, w2t)

    return out if Lp == L else out[..., :L]


def se_layer_ref(x, w1, w2):
    # Pure-JAX reference matching the PyTorch SE semantics.
    y = jnp.mean(x.astype(jnp.float32), axis=-1)                     # (B, C)
    h = jnp.maximum(y @ w1.astype(jnp.float32).T, 0.0)               # (B, C//r)
    s = jax.nn.sigmoid(h @ w2.astype(jnp.float32).T)                 # (B, C)
    return (x * s[:, :, None].astype(x.dtype)).astype(x.dtype)


if __name__ == "__main__":
    key = jax.random.PRNGKey(0)
    kx, k1, k2 = jax.random.split(key, 3)

    # L deliberately NOT a multiple of 128 to exercise the lane-dense padding path.
    B, C, L = 8, 64, 144
    reduction = 16
    Cr = C // reduction

    x = jax.random.normal(kx, (B, C, L), dtype=jnp.float32)
    # PyTorch Linear layout: (out_features, in_features).
    w1 = jax.random.normal(k1, (Cr, C), dtype=jnp.float32) * (1.0 / jnp.sqrt(C))
    w2 = jax.random.normal(k2, (C, Cr), dtype=jnp.float32) * (1.0 / jnp.sqrt(Cr))

    out = jax.block_until_ready(se_layer(x, w1, w2))
    ref = se_layer_ref(x, w1, w2)

    assert out.shape == (B, C, L)
    assert jnp.allclose(out, ref, atol=2e-5, rtol=2e-5), "mismatch vs reference"
    print("KERNEL_OK")
</pallas_src>

<mosaic_0001>
module attributes {stable_mosaic.version = 11 : i64} {
  func.func @_se_kernel(%arg0: i32, %arg1: memref<8x64x256xf32, #tpu.memory_space<vmem>>, %arg2: memref<64x4xf32, #tpu.memory_space<vmem>>, %arg3: memref<4x64xf32, #tpu.memory_space<vmem>>, %arg4: memref<8x64x256xf32, #tpu.memory_space<vmem>>) attributes {dimension_semantics = [#tpu.dimension_semantics<parallel>], iteration_bounds = array<i64: 1>, scalar_prefetch = 0 : i64, scratch_operands = 0 : i64, tpu.core_type = #tpu.core_type<tc>, window_params = [{transform_indices = @transform_0, window_bounds = array<i64: 8, 64, 256>}, {pipeline_mode = #tpu.pipeline_mode<synchronous>, transform_indices = @transform_1, window_bounds = array<i64: 64, 4>}, {pipeline_mode = #tpu.pipeline_mode<synchronous>, transform_indices = @transform_2, window_bounds = array<i64: 4, 64>}, {transform_indices = @transform_3, window_bounds = array<i64: 8, 64, 256>}]} {
    %c0 = arith.constant 0 : index
    %c0_0 = arith.constant 0 : index
    %c0_1 = arith.constant 0 : index
    %0 = vector.load %arg1[%c0, %c0_0, %c0_1] : memref<8x64x256xf32, #tpu.memory_space<vmem>>, vector<8x64x256xf32>
    %cst = arith.constant dense<0.000000e+00> : vector<8x64xf32>
    %1 = vector.multi_reduction <add>, %0, %cst [2] : vector<8x64x256xf32> to vector<8x64xf32>
    %cst_2 = arith.constant 0.0069444445 : f32
    %2 = vector.broadcast %cst_2 : f32 to vector<8x64xf32>
    %3 = arith.mulf %1, %2 : vector<8x64xf32>
    %c0_3 = arith.constant 0 : index
    %c0_4 = arith.constant 0 : index
    %4 = vector.load %arg2[%c0_3, %c0_4] : memref<64x4xf32, #tpu.memory_space<vmem>>, vector<64x4xf32>
    %cst_5 = arith.constant dense<0.000000e+00> : vector<8x4xf32>
    %5 = tpu.matmul %3, %4, %cst_5 {dimension_numbers = #tpu.dot_dimension_numbers<[1], [0], [0], [1], [0, 0, 1, 1], [], []>} : vector<8x64xf32>, vector<64x4xf32>, vector<8x4xf32> -> vector<8x4xf32>
    %cst_6 = arith.constant 0.000000e+00 : f32
    %6 = vector.broadcast %cst_6 : f32 to vector<8x4xf32>
    %7 = arith.maximumf %5, %6 : vector<8x4xf32>
    %c0_7 = arith.constant 0 : index
    %c0_8 = arith.constant 0 : index
    %8 = vector.load %arg3[%c0_7, %c0_8] : memref<4x64xf32, #tpu.memory_space<vmem>>, vector<4x64xf32>
    %cst_9 = arith.constant dense<0.000000e+00> : vector<8x64xf32>
    %9 = tpu.matmul %7, %8, %cst_9 {dimension_numbers = #tpu.dot_dimension_numbers<[1], [0], [0], [1], [0, 0, 1, 1], [], []>} : vector<8x4xf32>, vector<4x64xf32>, vector<8x64xf32> -> vector<8x64xf32>
    %10 = arith.negf %9 : vector<8x64xf32>
    %11 = math.exp %10 : vector<8x64xf32>
    %cst_10 = arith.constant 1.000000e+00 : f32
    %12 = vector.broadcast %cst_10 : f32 to vector<8x64xf32>
    %13 = arith.addf %12, %11 : vector<8x64xf32>
    %14 = arith.divf %12, %13 : vector<8x64xf32>
    %15 = vector.shape_cast %14 : vector<8x64xf32> to vector<8x64x1xf32>
    %16 = vector.broadcast %15 : vector<8x64x1xf32> to vector<8x64x256xf32>
    %17 = arith.mulf %0, %16 : vector<8x64x256xf32>
    %c0_11 = arith.constant 0 : index
    %c0_12 = arith.constant 0 : index
    %c0_13 = arith.constant 0 : index
    %18 = vector.load %arg4[%c0_11, %c0_12, %c0_13] : memref<8x64x256xf32, #tpu.memory_space<vmem>>, vector<8x64x256xf32>
    tpu.vector_store %arg4[%c0_11, %c0_12, %c0_13], %17 {strides = array<i32>} : memref<8x64x256xf32, #tpu.memory_space<vmem>>, vector<8x64x256xf32>,
    return
  }
  func.func @transform_0(%arg0: i32) -> (i32, i32, i32) {
    %c0_i32 = arith.constant 0 : i32
    %c0_i32_0 = arith.constant 0 : i32
    %c0_i32_1 = arith.constant 0 : i32
    return %arg0, %c0_i32, %c0_i32_0 : i32, i32, i32
  }
  func.func @transform_1(%arg0: i32) -> (i32, i32) {
    %c0_i32 = arith.constant 0 : i32
    %c0_i32_0 = arith.constant 0 : i32
    %c0_i32_1 = arith.constant 0 : i32
    return %c0_i32, %c0_i32_0 : i32, i32
  }
  func.func @transform_2(%arg0: i32) -> (i32, i32) {
    %c0_i32 = arith.constant 0 : i32
    %c0_i32_0 = arith.constant 0 : i32
    %c0_i32_1 = arith.constant 0 : i32
    return %c0_i32, %c0_i32_0 : i32, i32
  }
  func.func @transform_3(%arg0: i32) -> (i32, i32, i32) {
    %c0_i32 = arith.constant 0 : i32
    %c0_i32_0 = arith.constant 0 : i32
    %c0_i32_1 = arith.constant 0 : i32
    return %arg0, %c0_i32, %c0_i32_0 : i32, i32, i32
  }
}

</mosaic_0001>

<llo_original>
// kernel: tpu_custom_call.1
$region0: #{tpu_custom_call.1}
  #allocation0 [shape = 'u32[]', space=smem, size = 0x4, offset = 0x4, fixed_abs, tag = 'smem constant byte address 0x4 - core index']
  #allocation1 [shape = 'u32[72,128]{1,0:T(1,128)}', space=vmem, size = 0x9000, scoped, tag = 'internal scratch']
  %s0 = inlined_call_operand.hbm [shape: f32[8,64,256], index: 0, kind: input, shape index: {}]
  %s1 = inlined_call_operand.vmem [shape: f32[64,4], index: 1, kind: input, shape index: {}]
  %s2 = inlined_call_operand.vmem [shape: f32[4,64], index: 2, kind: input, shape index: {}]
  %s3 = inlined_call_operand.hbm [shape: f32[8,64,256], index: 3, kind: output, shape index: {}]
  %s4 = sld [smem:[#allocation0]]
  $region26: #{tpu_custom_call.1} parent=0
    _
  %s6 = ssub.s32 1, %s4
  %s7 = scalar_select 0, %s6, %s4
  $region1: #{tpu_custom_call.1} parent=0
    #allocation2 [shape = 'u8[524288]{0}', space=vmem, size = 0x80000, scoped, tag = 'input window, operand 0, single buffered']
    #allocation3 [shape = 's32[1]{0}', space=sflag, size = 0x4, scoped, tag = 'scoped memory for tpu_custom_call.1']
    #allocation4 [shape = 's32[1]{0}', space=sflag, size = 0x4, scoped, tag = 'scoped memory for tpu_custom_call.1']
    #allocation5 [shape = 'u8[524288]{0}', space=vmem, size = 0x80000, scoped, tag = 'output window, operand 0, single buffered']
    %8 = vsyncpa [#allocation3], 0
    %9 = vsyncpa [#allocation4], 0
    // Predicated region
    $region2: #{tpu_custom_call.1} parent=1 // pred_check
      _
    $region3: #{tpu_custom_call.1} parent=1 // pred_check_branch
      %11 = sbr.rel (0) target = $region5
    $region4: #{tpu_custom_call.1} parent=1 // pred_region
      %13 = vsyncadd [#allocation3], 0
      %s14 = sshll.u32 %s0, 4
      %s15 = int_to_ptr.hbm [resolvable:$true] %s14
      %s16 = sshll.u32 [#allocation2], 4
      %s17 = int_to_ptr.vmem [resolvable:$true] %s16
      %22 = dma.hbm_to_vmem [thread:$0]  %s15, 16384, %s17, [#allocation3], 256, 256, 16
    $region5: #{tpu_custom_call.1} parent=1 // pred_fallthru
      _
    // Predicated region
    $region6: #{tpu_custom_call.1} parent=1 // pred_check
      _
    $region7: #{tpu_custom_call.1} parent=1 // pred_check_branch
      %24 = sbr.rel (0) target = $region9
    $region8: #{tpu_custom_call.1} parent=1 // pred_region
      _
    $region9: #{tpu_custom_call.1} parent=1 // pred_fallthru
      _
    // Predicated region
    $region10: #{tpu_custom_call.1} parent=1 // pred_check
      _
    $region11: #{tpu_custom_call.1} parent=1 // pred_check_branch
      %26 = sbr.rel (0) target = $region13
    $region12: #{tpu_custom_call.1} parent=1 // pred_region
      _
    $region13: #{tpu_custom_call.1} parent=1 // pred_fallthru
      _
    // Predicated region
    $region14: #{tpu_custom_call.1} parent=1 // pred_check
      _
    $region15: #{tpu_custom_call.1} parent=1 // pred_check_branch
      %28 = sbr.rel (0) target = $region17
    $region16: #{tpu_custom_call.1} parent=1 // pred_region
      %30 = dma.done [#allocation3], 16384
    $region17: #{tpu_custom_call.1} parent=1 // pred_fallthru
      _
    %v31 = vld [vmem:[#allocation2] sm:$0xff]
    %v32 = vld [vmem:[#allocation2 + $0x8] sm:$0xff]
    %v33 = vld [vmem:[#allocation2 + $0x10] sm:$0xff]
    %v34 = vld [vmem:[#allocation2 + $0x18] sm:$0xff]
    %v35 = vld [vmem:[#allocation2 + $0x20] sm:$0xff]
    %v36 = vld [vmem:[#allocation2 + $0x28] sm:$0xff]
    %v37 = vld [vmem:[#allocation2 + $0x30] sm:$0xff]
    %v38 = vld [vmem:[#allocation2 + $0x38] sm:$0xff]
    %v39 = vld [vmem:[#allocation2 + $0x40] sm:$0xff]
    %v40 = vld [vmem:[#allocation2 + $0x48] sm:$0xff]
    %v41 = vld [vmem:[#allocation2 + $0x50] sm:$0xff]
    %v42 = vld [vmem:[#allocation2 + $0x58] sm:$0xff]
    %v43 = vld [vmem:[#allocation2 + $0x60] sm:$0xff]
    %v44 = vld [vmem:[#allocation2 + $0x68] sm:$0xff]
    %v45 = vld [vmem:[#allocation2 + $0x70] sm:$0xff]
    %v46 = vld [vmem:[#allocation2 + $0x78] sm:$0xff]
    %v47 = vld [vmem:[#allocation2 + $0x80] sm:$0xff]
    %v48 = vld [vmem:[#allocation2 + $0x88] sm:$0xff]
    %v49 = vld [vmem:[#allocation2 + $0x90] sm:$0xff]
    %v50 = vld [vmem:[#allocation2 + $0x98] sm:$0xff]
    %v51 = vld [vmem:[#allocation2 + $0xa0] sm:$0xff]
    %v52 = vld [vmem:[#allocation2 + $0xa8] sm:$0xff]
    %v53 = vld [vmem:[#allocation2 + $0xb0] sm:$0xff]
    %v54 = vld [vmem:[#allocation2 + $0xb8] sm:$0xff]
    %v55 = vld [vmem:[#allocation2 + $0xc0] sm:$0xff]
    %v56 = vld [vmem:[#allocation2 + $0xc8] sm:$0xff]
    %v57 = vld [vmem:[#allocation2 + $0xd0] sm:$0xff]
    %v58 = vld [vmem:[#allocation2 + $0xd8] sm:$0xff]
    %v59 = vld [vmem:[#allocation2 + $0xe0] sm:$0xff]
    %v60 = vld [vmem:[#allocation2 + $0xe8] sm:$0xff]
    %v61 = vld [vmem:[#allocation2 + $0xf0] sm:$0xff]
    %v62 = vld [vmem:[#allocation2 + $0xf8] sm:$0xff]
    %v63 = vld [vmem:[#allocation2 + $0x100] sm:$0xff]
    %v64 = vld [vmem:[#allocation2 + $0x108] sm:$0xff]
    %v65 = vld [vmem:[#allocation2 + $0x110] sm:$0xff]
    %v66 = vld [vmem:[#allocation2 + $0x118] sm:$0xff]
    %v67 = vld [vmem:[#allocation2 + $0x120] sm:$0xff]
    %v68 = vld [vmem:[#allocation2 + $0x128] sm:$0xff]
    %v69 = vld [vmem:[#allocation2 + $0x130] sm:$0xff]
    %v70 = vld [vmem:[#allocation2 + $0x138] sm:$0xff]
    %v71 = vld [vmem:[#allocation2 + $0x140] sm:$0xff]
    %v72 = vld [vmem:[#allocation2 + $0x148] sm:$0xff]
    %v73 = vld [vmem:[#allocation2 + $0x150] sm:$0xff]
    %v74 = vld [vmem:[#allocation2 + $0x158] sm:$0xff]
    %v75 = vld [vmem:[#allocation2 + $0x160] sm:$0xff]
    %v76 = vld [vmem:[#allocation2 + $0x168] sm:$0xff]
    %v77 = vld [vmem:[#allocation2 + $0x170] sm:$0xff]
    %v78 = vld [vmem:[#allocation2 + $0x178] sm:$0xff]
    %v79 = vld [vmem:[#allocation2 + $0x180] sm:$0xff]
    %v80 = vld [vmem:[#allocation2 + $0x188] sm:$0xff]
    %v81 = vld [vmem:[#allocation2 + $0x190] sm:$0xff]
    %v82 = vld [vmem:[#allocation2 + $0x198] sm:$0xff]
    %v83 = vld [vmem:[#allocation2 + $0x1a0] sm:$0xff]
    %v84 = vld [vmem:[#allocation2 + $0x1a8] sm:$0xff]
    %v85 = vld [vmem:[#allocation2 + $0x1b0] sm:$0xff]
    %v86 = vld [vmem:[#allocation2 + $0x1b8] sm:$0xff]
    %v87 = vld [vmem:[#allocation2 + $0x1c0] sm:$0xff]
    %v88 = vld [vmem:[#allocation2 + $0x1c8] sm:$0xff]
    %v89 = vld [vmem:[#allocation2 + $0x1d0] sm:$0xff]
    %v90 = vld [vmem:[#allocation2 + $0x1d8] sm:$0xff]
    %v91 = vld [vmem:[#allocation2 + $0x1e0] sm:$0xff]
    %v92 = vld [vmem:[#allocation2 + $0x1e8] sm:$0xff]
    %v93 = vld [vmem:[#allocation2 + $0x1f0] sm:$0xff]
    %v94 = vld [vmem:[#allocation2 + $0x1f8] sm:$0xff]
    %v95 = vld [vmem:[#allocation2 + $0x200] sm:$0xff]
    %v96 = vld [vmem:[#allocation2 + $0x208] sm:$0xff]
    %v97 = vld [vmem:[#allocation2 + $0x210] sm:$0xff]
    %v98 = vld [vmem:[#allocation2 + $0x218] sm:$0xff]
    %v99 = vld [vmem:[#allocation2 + $0x220] sm:$0xff]
    %v100 = vld [vmem:[#allocation2 + $0x228] sm:$0xff]
    %v101 = vld [vmem:[#allocation2 + $0x230] sm:$0xff]
    %v102 = vld [vmem:[#allocation2 + $0x238] sm:$0xff]
    %v103 = vld [vmem:[#allocation2 + $0x240] sm:$0xff]
    %v104 = vld [vmem:[#allocation2 + $0x248] sm:$0xff]
    %v105 = vld [vmem:[#allocation2 + $0x250] sm:$0xff]
    %v106 = vld [vmem:[#allocation2 + $0x258] sm:$0xff]
    %v107 = vld [vmem:[#allocation2 + $0x260] sm:$0xff]
    %v108 = vld [vmem:[#allocation2 + $0x268] sm:$0xff]
    %v109 = vld [vmem:[#allocation2 + $0x270] sm:$0xff]
    %v110 = vld [vmem:[#allocation2 + $0x278] sm:$0xff]
    %v111 = vld [vmem:[#allocation2 + $0x280] sm:$0xff]
    %v112 = vld [vmem:[#allocation2 + $0x288] sm:$0xff]
    %v113 = vld [vmem:[#allocation2 + $0x290] sm:$0xff]
    %v114 = vld [vmem:[#allocation2 + $0x298] sm:$0xff]
    %v115 = vld [vmem:[#allocation2 + $0x2a0] sm:$0xff]
    %v116 = vld [vmem:[#allocation2 + $0x2a8] sm:$0xff]
    %v117 = vld [vmem:[#allocation2 + $0x2b0] sm:$0xff]
    %v118 = vld [vmem:[#allocation2 + $0x2b8] sm:$0xff]
    %v119 = vld [vmem:[#allocation2 + $0x2c0] sm:$0xff]
    %v120 = vld [vmem:[#allocation2 + $0x2c8] sm:$0xff]
    %v121 = vld [vmem:[#allocation2 + $0x2d0] sm:$0xff]
    %v122 = vld [vmem:[#allocation2 + $0x2d8] sm:$0xff]
    %v123 = vld [vmem:[#allocation2 + $0x2e0] sm:$0xff]
    %v124 = vld [vmem:[#allocation2 + $0x2e8] sm:$0xff]
    %v125 = vld [vmem:[#allocation2 + $0x2f0] sm:$0xff]
    %v126 = vld [vmem:[#allocation2 + $0x2f8] sm:$0xff]
    %v127 = vld [vmem:[#allocation2 + $0x300] sm:$0xff]
    %v128 = vld [vmem:[#allocation2 + $0x308] sm:$0xff]
    %v129 = vld [vmem:[#allocation2 + $0x310] sm:$0xff]
    %v130 = vld [vmem:[#allocation2 + $0x318] sm:$0xff]
    %v131 = vld [vmem:[#allocation2 + $0x320] sm:$0xff]
    %v132 = vld [vmem:[#allocation2 + $0x328] sm:$0xff]
    %v133 = vld [vmem:[#allocation2 + $0x330] sm:$0xff]
    %v134 = vld [vmem:[#allocation2 + $0x338] sm:$0xff]
    %v135 = vld [vmem:[#allocation2 + $0x340] sm:$0xff]
    %v136 = vld [vmem:[#allocation2 + $0x348] sm:$0xff]
    %v137 = vld [vmem:[#allocation2 + $0x350] sm:$0xff]
    %v138 = vld [vmem:[#allocation2 + $0x358] sm:$0xff]
    %v139 = vld [vmem:[#allocation2 + $0x360] sm:$0xff]
    %v140 = vld [vmem:[#allocation2 + $0x368] sm:$0xff]
    %v141 = vld [vmem:[#allocation2 + $0x370] sm:$0xff]
    %v142 = vld [vmem:[#allocation2 + $0x378] sm:$0xff]
    %v143 = vld [vmem:[#allocation2 + $0x380] sm:$0xff]
    %v144 = vld [vmem:[#allocation2 + $0x388] sm:$0xff]
    %v145 = vld [vmem:[#allocation2 + $0x390] sm:$0xff]
    %v146 = vld [vmem:[#allocation2 + $0x398] sm:$0xff]
    %v147 = vld [vmem:[#allocation2 + $0x3a0] sm:$0xff]
    %v148 = vld [vmem:[#allocation2 + $0x3a8] sm:$0xff]
    %v149 = vld [vmem:[#allocation2 + $0x3b0] sm:$0xff]
    %v150 = vld [vmem:[#allocation2 + $0x3b8] sm:$0xff]
    %v151 = vld [vmem:[#allocation2 + $0x3c0] sm:$0xff]
    %v152 = vld [vmem:[#allocation2 + $0x3c8] sm:$0xff]
    %v153 = vld [vmem:[#allocation2 + $0x3d0] sm:$0xff]
    %v154 = vld [vmem:[#allocation2 + $0x3d8] sm:$0xff]
    %v155 = vld [vmem:[#allocation2 + $0x3e0] sm:$0xff]
    %v156 = vld [vmem:[#allocation2 + $0x3e8] sm:$0xff]
    %v157 = vld [vmem:[#allocation2 + $0x3f0] sm:$0xff]
    %v158 = vld [vmem:[#allocation2 + $0x3f8] sm:$0xff]
    %v159 = vadd.f32 %v31, %v32
    %160 = vadd.xlane.f32.xlu0 %v159
    %v161 = vpop.xlane.xlu0 %160
    %v162 = vadd.f32 %v33, %v34
    %163 = vadd.xlane.f32.xlu0 %v162
    %v164 = vpop.xlane.xlu0 %163
    %v165 = vadd.f32 %v35, %v36
    %166 = vadd.xlane.f32.xlu0 %v165
    %v167 = vpop.xlane.xlu0 %166
    %v168 = vadd.f32 %v37, %v38
    %169 = vadd.xlane.f32.xlu0 %v168
    %v170 = vpop.xlane.xlu0 %169
    %v171 = vadd.f32 %v39, %v40
    %172 = vadd.xlane.f32.xlu0 %v171
    %v173 = vpop.xlane.xlu0 %172
    %v174 = vadd.f32 %v41, %v42
    %175 = vadd.xlane.f32.xlu0 %v174
    %v176 = vpop.xlane.xlu0 %175
    %v177 = vadd.f32 %v43, %v44
    %178 = vadd.xlane.f32.xlu0 %v177
    %v179 = vpop.xlane.xlu0 %178
    %v180 = vadd.f32 %v45, %v46
    %181 = vadd.xlane.f32.xlu0 %v180
    %v182 = vpop.xlane.xlu0 %181
    %v183 = vadd.f32 %v47, %v48
    %184 = vadd.xlane.f32.xlu0 %v183
    %v185 = vpop.xlane.xlu0 %184
    %v186 = vadd.f32 %v49, %v50
    %187 = vadd.xlane.f32.xlu0 %v186
    %v188 = vpop.xlane.xlu0 %187
    %v189 = vadd.f32 %v51, %v52
    %190 = vadd.xlane.f32.xlu0 %v189
    %v191 = vpop.xlane.xlu0 %190
    %v192 = vadd.f32 %v53, %v54
    %193 = vadd.xlane.f32.xlu0 %v192
    %v194 = vpop.xlane.xlu0 %193
    %v195 = vadd.f32 %v55, %v56
    %196 = vadd.xlane.f32.xlu0 %v195
    %v197 = vpop.xlane.xlu0 %196
    %v198 = vadd.f32 %v57, %v58
    %199 = vadd.xlane.f32.xlu0 %v198
    %v200 = vpop.xlane.xlu0 %199
    %v201 = vadd.f32 %v59, %v60
    %202 = vadd.xlane.f32.xlu0 %v201
    %v203 = vpop.xlane.xlu0 %202
    %v204 = vadd.f32 %v61, %v62
    %205 = vadd.xlane.f32.xlu0 %v204
    %v206 = vpop.xlane.xlu0 %205
    %v207 = vadd.f32 %v63, %v64
    %208 = vadd.xlane.f32.xlu0 %v207
    %v209 = vpop.xlane.xlu0 %208
    %v210 = vadd.f32 %v65, %v66
    %211 = vadd.xlane.f32.xlu0 %v210
    %v212 = vpop.xlane.xlu0 %211
    %v213 = vadd.f32 %v67, %v68
    %214 = vadd.xlane.f32.xlu0 %v213
    %v215 = vpop.xlane.xlu0 %214
    %v216 = vadd.f32 %v69, %v70
    %217 = vadd.xlane.f32.xlu0 %v216
    %v218 = vpop.xlane.xlu0 %217
    %v219 = vadd.f32 %v71, %v72
    %220 = vadd.xlane.f32.xlu0 %v219
    %v221 = vpop.xlane.xlu0 %220
    %v222 = vadd.f32 %v73, %v74
    %223 = vadd.xlane.f32.xlu0 %v222
    %v224 = vpop.xlane.xlu0 %223
    %v225 = vadd.f32 %v75, %v76
    %226 = vadd.xlane.f32.xlu0 %v225
    %v227 = vpop.xlane.xlu0 %226
    %v228 = vadd.f32 %v77, %v78
    %229 = vadd.xlane.f32.xlu0 %v228
    %v230 = vpop.xlane.xlu0 %229
    %v231 = vadd.f32 %v79, %v80
    %232 = vadd.xlane.f32.xlu0 %v231
    %v233 = vpop.xlane.xlu0 %232
    %v234 = vadd.f32 %v81, %v82
    %235 = vadd.xlane.f32.xlu0 %v234
    %v236 = vpop.xlane.xlu0 %235
    %v237 = vadd.f32 %v83, %v84
    %238 = vadd.xlane.f32.xlu0 %v237
    %v239 = vpop.xlane.xlu0 %238
    %v240 = vadd.f32 %v85, %v86
    %241 = vadd.xlane.f32.xlu0 %v240
    %v242 = vpop.xlane.xlu0 %241
    %v243 = vadd.f32 %v87, %v88
    %244 = vadd.xlane.f32.xlu0 %v243
    %v245 = vpop.xlane.xlu0 %244
    %v246 = vadd.f32 %v89, %v90
    %247 = vadd.xlane.f32.xlu0 %v246
    %v248 = vpop.xlane.xlu0 %247
    %v249 = vadd.f32 %v91, %v92
    %250 = vadd.xlane.f32.xlu0 %v249
    %v251 = vpop.xlane.xlu0 %250
    %v252 = vadd.f32 %v93, %v94
    %253 = vadd.xlane.f32.xlu0 %v252
    %v254 = vpop.xlane.xlu0 %253
    %v255 = vadd.f32 %v95, %v96
    %256 = vadd.xlane.f32.xlu0 %v255
    %v257 = vpop.xlane.xlu0 %256
    %v258 = vadd.f32 %v97, %v98
    %259 = vadd.xlane.f32.xlu0 %v258
    %v260 = vpop.xlane.xlu0 %259
    %v261 = vadd.f32 %v99, %v100
    %262 = vadd.xlane.f32.xlu0 %v261
    %v263 = vpop.xlane.xlu0 %262
    %v264 = vadd.f32 %v101, %v102
    %265 = vadd.xlane.f32.xlu0 %v264
    %v266 = vpop.xlane.xlu0 %265
    %v267 = vadd.f32 %v103, %v104
    %268 = vadd.xlane.f32.xlu0 %v267
    %v269 = vpop.xlane.xlu0 %268
    %v270 = vadd.f32 %v105, %v106
    %271 = vadd.xlane.f32.xlu0 %v270
    %v272 = vpop.xlane.xlu0 %271
    %v273 = vadd.f32 %v107, %v108
    %274 = vadd.xlane.f32.xlu0 %v273
    %v275 = vpop.xlane.xlu0 %274
    %v276 = vadd.f32 %v109, %v110
    %277 = vadd.xlane.f32.xlu0 %v276
    %v278 = vpop.xlane.xlu0 %277
    %v279 = vadd.f32 %v111, %v112
    %280 = vadd.xlane.f32.xlu0 %v279
    %v281 = vpop.xlane.xlu0 %280
    %v282 = vadd.f32 %v113, %v114
    %283 = vadd.xlane.f32.xlu0 %v282
    %v284 = vpop.xlane.xlu0 %283
    %v285 = vadd.f32 %v115, %v116
    %286 = vadd.xlane.f32.xlu0 %v285
    %v287 = vpop.xlane.xlu0 %286
    %v288 = vadd.f32 %v117, %v118
    %289 = vadd.xlane.f32.xlu0 %v288
    %v290 = vpop.xlane.xlu0 %289
    %v291 = vadd.f32 %v119, %v120
    %292 = vadd.xlane.f32.xlu0 %v291
    %v293 = vpop.xlane.xlu0 %292
    %v294 = vadd.f32 %v121, %v122
    %295 = vadd.xlane.f32.xlu0 %v294
    %v296 = vpop.xlane.xlu0 %295
    %v297 = vadd.f32 %v123, %v124
    %298 = vadd.xlane.f32.xlu0 %v297
    %v299 = vpop.xlane.xlu0 %298
    %v300 = vadd.f32 %v125, %v126
    %301 = vadd.xlane.f32.xlu0 %v300
    %v302 = vpop.xlane.xlu0 %301
    %v303 = vadd.f32 %v127, %v128
    %304 = vadd.xlane.f32.xlu0 %v303
    %v305 = vpop.xlane.xlu0 %304
    %v306 = vadd.f32 %v129, %v130
    %307 = vadd.xlane.f32.xlu0 %v306
    %v308 = vpop.xlane.xlu0 %307
    %v309 = vadd.f32 %v131, %v132
    %310 = vadd.xlane.f32.xlu0 %v309
    %v311 = vpop.xlane.xlu0 %310
    %v312 = vadd.f32 %v133, %v134
    %313 = vadd.xlane.f32.xlu0 %v312
    %v314 = vpop.xlane.xlu0 %313
    %v315 = vadd.f32 %v135, %v136
    %316 = vadd.xlane.f32.xlu0 %v315
    %v317 = vpop.xlane.xlu0 %316
    %v318 = vadd.f32 %v137, %v138
    %319 = vadd.xlane.f32.xlu0 %v318
    %v320 = vpop.xlane.xlu0 %319
    %v321 = vadd.f32 %v139, %v140
    %322 = vadd.xlane.f32.xlu0 %v321
    %v323 = vpop.xlane.xlu0 %322
    %v324 = vadd.f32 %v141, %v142
    %325 = vadd.xlane.f32.xlu0 %v324
    %v326 = vpop.xlane.xlu0 %325
    %v327 = vadd.f32 %v143, %v144
    %328 = vadd.xlane.f32.xlu0 %v327
    %v329 = vpop.xlane.xlu0 %328
    %v330 = vadd.f32 %v145, %v146
    %331 = vadd.xlane.f32.xlu0 %v330
    %v332 = vpop.xlane.xlu0 %331
    %v333 = vadd.f32 %v147, %v148
    %334 = vadd.xlane.f32.xlu0 %v333
    %v335 = vpop.xlane.xlu0 %334
    %v336 = vadd.f32 %v149, %v150
    %337 = vadd.xlane.f32.xlu0 %v336
    %v338 = vpop.xlane.xlu0 %337
    %v339 = vadd.f32 %v151, %v152
    %340 = vadd.xlane.f32.xlu0 %v339
    %v341 = vpop.xlane.xlu0 %340
    %v342 = vadd.f32 %v153, %v154
    %343 = vadd.xlane.f32.xlu0 %v342
    %v344 = vpop.xlane.xlu0 %343
    %v345 = vadd.f32 %v155, %v156
    %346 = vadd.xlane.f32.xlu0 %v345
    %v347 = vpop.xlane.xlu0 %346
    %v348 = vadd.f32 %v157, %v158
    %349 = vadd.xlane.f32.xlu0 %v348
    %v350 = vpop.xlane.xlu0 %349
    %v351 = vmul.f32 %v161, 0.0069444445
    %v352 = vmul.f32 %v164, 0.0069444445
    %v353 = vmul.f32 %v167, 0.0069444445
    %v354 = vmul.f32 %v170, 0.0069444445
    %v355 = vmul.f32 %v173, 0.0069444445
    %v356 = vmul.f32 %v176, 0.0069444445
    %v357 = vmul.f32 %v179, 0.0069444445
    %v358 = vmul.f32 %v182, 0.0069444445
    %v359 = vmul.f32 %v185, 0.0069444445
    %v360 = vmul.f32 %v188, 0.0069444445
    %v361 = vmul.f32 %v191, 0.0069444445
    %v362 = vmul.f32 %v194, 0.0069444445
    %v363 = vmul.f32 %v197, 0.0069444445
    %v364 = vmul.f32 %v200, 0.0069444445
    %v365 = vmul.f32 %v203, 0.0069444445
    %v366 = vmul.f32 %v206, 0.0069444445
    %v367 = vmul.f32 %v209, 0.0069444445
    %v368 = vmul.f32 %v212, 0.0069444445
    %v369 = vmul.f32 %v215, 0.0069444445
    %v370 = vmul.f32 %v218, 0.0069444445
    %v371 = vmul.f32 %v221, 0.0069444445
    %v372 = vmul.f32 %v224, 0.0069444445
    %v373 = vmul.f32 %v227, 0.0069444445
    %v374 = vmul.f32 %v230, 0.0069444445
    %v375 = vmul.f32 %v233, 0.0069444445
    %v376 = vmul.f32 %v236, 0.0069444445
    %v377 = vmul.f32 %v239, 0.0069444445
    %v378 = vmul.f32 %v242, 0.0069444445
    %v379 = vmul.f32 %v245, 0.0069444445
    %v380 = vmul.f32 %v248, 0.0069444445
    %v381 = vmul.f32 %v251, 0.0069444445
    %v382 = vmul.f32 %v254, 0.0069444445
    %v383 = vmul.f32 %v257, 0.0069444445
    %v384 = vmul.f32 %v260, 0.0069444445
    %v385 = vmul.f32 %v263, 0.0069444445
    %v386 = vmul.f32 %v266, 0.0069444445
    %v387 = vmul.f32 %v269, 0.0069444445
    %v388 = vmul.f32 %v272, 0.0069444445
    %v389 = vmul.f32 %v275, 0.0069444445
    %v390 = vmul.f32 %v278, 0.0069444445
    %v391 = vmul.f32 %v281, 0.0069444445
    %v392 = vmul.f32 %v284, 0.0069444445
    %v393 = vmul.f32 %v287, 0.0069444445
    %v394 = vmul.f32 %v290, 0.0069444445
    %v395 = vmul.f32 %v293, 0.0069444445
    %v396 = vmul.f32 %v296, 0.0069444445
    %v397 = vmul.f32 %v299, 0.0069444445
    %v398 = vmul.f32 %v302, 0.0069444445
    %v399 = vmul.f32 %v305, 0.0069444445
    %v400 = vmul.f32 %v308, 0.0069444445
    %v401 = vmul.f32 %v311, 0.0069444445
    %v402 = vmul.f32 %v314, 0.0069444445
    %v403 = vmul.f32 %v317, 0.0069444445
    %v404 = vmul.f32 %v320, 0.0069444445
    %v405 = vmul.f32 %v323, 0.0069444445
    %v406 = vmul.f32 %v326, 0.0069444445
    %v407 = vmul.f32 %v329, 0.0069444445
    %v408 = vmul.f32 %v332, 0.0069444445
    %v409 = vmul.f32 %v335, 0.0069444445
    %v410 = vmul.f32 %v338, 0.0069444445
    %v411 = vmul.f32 %v341, 0.0069444445
    %v412 = vmul.f32 %v344, 0.0069444445
    %v413 = vmul.f32 %v347, 0.0069444445
    %v414 = vmul.f32 %v350, 0.0069444445
    %v415 = vld [vmem:[%s1] sm:$0xff]
    %v416 = vld [vmem:[%s1 + $0x8] sm:$0xff]
    %v417 = vld [vmem:[%s1 + $0x10] sm:$0xff]
    %v418 = vld [vmem:[%s1 + $0x18] sm:$0xff]
    %v419 = vld [vmem:[%s1 + $0x20] sm:$0xff]
    %v420 = vld [vmem:[%s1 + $0x28] sm:$0xff]
    %v421 = vld [vmem:[%s1 + $0x30] sm:$0xff]
    %v422 = vld [vmem:[%s1 + $0x38] sm:$0xff]
    %v487 = vlaneseq
    %v488 = vand.u32 %v487, 127
    %v489 = vperm.slane %v351, %v488
    %v490 = vadd.s32 %v488, 4294967288
    %v491 = vperm.slane %v352, %v490
    %vm492 = vcmask 130112
    %v493 = vsel %vm492, %v491, %v489
    %v494 = vadd.s32 %v488, 4294967280
    %v495 = vperm.slane %v353, %v494
    %vm496 = vcmask 195712
    %v497 = vsel %vm496, %v495, %v493
    %v498 = vadd.s32 %v488, 4294967272
    %v499 = vperm.slane %v354, %v498
    %vm500 = vcmask 261312
    %v501 = vsel %vm500, %v499, %v497
    %v502 = vadd.s32 %v488, 4294967264
    %v503 = vperm.slane %v355, %v502
    %vm504 = vcmask 326912
    %v505 = vsel %vm504, %v503, %v501
    %v506 = vadd.s32 %v488, 4294967256
    %v507 = vperm.slane %v356, %v506
    %vm508 = vcmask 392512
    %v509 = vsel %vm508, %v507, %v505
    %v510 = vadd.s32 %v488, 4294967248
    %v511 = vperm.slane %v357, %v510
    %vm512 = vcmask 458112
    %v513 = vsel %vm512, %v511, %v509
    %v514 = vadd.s32 %v488, 4294967240
    %v515 = vperm.slane %v358, %v514
    %vm516 = vcmask 523712
    %v517 = vsel %vm516, %v515, %v513
    %v518 = vperm.slane %v359, %v488
    %v519 = vperm.slane %v360, %v490
    %v520 = vsel %vm492, %v519, %v518
    %v521 = vperm.slane %v361, %v494
    %v522 = vsel %vm496, %v521, %v520
    %v523 = vperm.slane %v362, %v498
    %v524 = vsel %vm500, %v523, %v522
    %v525 = vperm.slane %v363, %v502
    %v526 = vsel %vm504, %v525, %v524
    %v527 = vperm.slane %v364, %v506
    %v528 = vsel %vm508, %v527, %v526
    %v529 = vperm.slane %v365, %v510
    %v530 = vsel %vm512, %v529, %v528
    %v531 = vperm.slane %v366, %v514
    %v532 = vsel %vm516, %v531, %v530
    %v533 = vperm.slane %v367, %v488
    %v534 = vperm.slane %v368, %v490
    %v535 = vsel %vm492, %v534, %v533
    %v536 = vperm.slane %v369, %v494
    %v537 = vsel %vm496, %v536, %v535
    %v538 = vperm.slane %v370, %v498
    %v539 = vsel %vm500, %v538, %v537
    %v540 = vperm.slane %v371, %v502
    %v541 = vsel %vm504, %v540, %v539
    %v542 = vperm.slane %v372, %v506
    %v543 = vsel %vm508, %v542, %v541
    %v544 = vperm.slane %v373, %v510
    %v545 = vsel %vm512, %v544, %v543
    %v546 = vperm.slane %v374, %v514
    %v547 = vsel %vm516, %v546, %v545
    %v548 = vperm.slane %v375, %v488
    %v549 = vperm.slane %v376, %v490
    %v550 = vsel %vm492, %v549, %v548
    %v551 = vperm.slane %v377, %v494
    %v552 = vsel %vm496, %v551, %v550
    %v553 = vperm.slane %v378, %v498
    %v554 = vsel %vm500, %v553, %v552
    %v555 = vperm.slane %v379, %v502
    %v556 = vsel %vm504, %v555, %v554
    %v557 = vperm.slane %v380, %v506
    %v558 = vsel %vm508, %v557, %v556
    %v559 = vperm.slane %v381, %v510
    %v560 = vsel %vm512, %v559, %v558
    %v561 = vperm.slane %v382, %v514
    %v562 = vsel %vm516, %v561, %v560
    %v563 = vperm.slane %v383, %v488
    %v564 = vperm.slane %v384, %v490
    %v565 = vsel %vm492, %v564, %v563
    %v566 = vperm.slane %v385, %v494
    %v567 = vsel %vm496, %v566, %v565
    %v568 = vperm.slane %v386, %v498
    %v569 = vsel %vm500, %v568, %v567
    %v570 = vperm.slane %v387, %v502
    %v571 = vsel %vm504, %v570, %v569
    %v572 = vperm.slane %v388, %v506
    %v573 = vsel %vm508, %v572, %v571
    %v574 = vperm.slane %v389, %v510
    %v575 = vsel %vm512, %v574, %v573
    %v576 = vperm.slane %v390, %v514
    %v577 = vsel %vm516, %v576, %v575
    %v578 = vperm.slane %v391, %v488
    %v579 = vperm.slane %v392, %v490
    %v580 = vsel %vm492, %v579, %v578
    %v581 = vperm.slane %v393, %v494
    %v582 = vsel %vm496, %v581, %v580
    %v583 = vperm.slane %v394, %v498
    %v584 = vsel %vm500, %v583, %v582
    %v585 = vperm.slane %v395, %v502
    %v586 = vsel %vm504, %v585, %v584
    %v587 = vperm.slane %v396, %v506
    %v588 = vsel %vm508, %v587, %v586
    %v589 = vperm.slane %v397, %v510
    %v590 = vsel %vm512, %v589, %v588
    %v591 = vperm.slane %v398, %v514
    %v592 = vsel %vm516, %v591, %v590
    %v593 = vperm.slane %v399, %v488
    %v594 = vperm.slane %v400, %v490
    %v595 = vsel %vm492, %v594, %v593
    %v596 = vperm.slane %v401, %v494
    %v597 = vsel %vm496, %v596, %v595
    %v598 = vperm.slane %v402, %v498
    %v599 = vsel %vm500, %v598, %v597
    %v600 = vperm.slane %v403, %v502
    %v601 = vsel %vm504, %v600, %v599
    %v602 = vperm.slane %v404, %v506
    %v603 = vsel %vm508, %v602, %v601
    %v604 = vperm.slane %v405, %v510
    %v605 = vsel %vm512, %v604, %v603
    %v606 = vperm.slane %v406, %v514
    %v607 = vsel %vm516, %v606, %v605
    %v608 = vperm.slane %v407, %v488
    %v609 = vperm.slane %v408, %v490
    %v610 = vsel %vm492, %v609, %v608
    %v611 = vperm.slane %v409, %v494
    %v612 = vsel %vm496, %v611, %v610
    %v613 = vperm.slane %v410, %v498
    %v614 = vsel %vm500, %v613, %v612
    %v615 = vperm.slane %v411, %v502
    %v616 = vsel %vm504, %v615, %v614
    %v617 = vperm.slane %v412, %v506
    %v618 = vsel %vm508, %v617, %v616
    %v619 = vperm.slane %v413, %v510
    %v620 = vsel %vm512, %v619, %v618
    %v621 = vperm.slane %v414, %v514
    %v622 = vsel %vm516, %v621, %v620
    %vm623 = vcmask 1041409
    %v624 = vsel %vm623, %v532, %v517
    %vm625 = vcmask 1042434
    %v626 = vsel %vm625, %v547, %v624
    %vm627 = vcmask 1043459
    %v628 = vsel %vm627, %v562, %v626
    %vm629 = vcmask 1044484
    %v630 = vsel %vm629, %v577, %v628
    %vm631 = vcmask 1045509
    %v632 = vsel %vm631, %v592, %v630
    %vm633 = vcmask 1046534
    %v634 = vsel %vm633, %v607, %v632
    %vm635 = vcmask 1047559
    %v636 = vsel %vm635, %v622, %v634
    %vm637 = vcmask 523264
    %v638 = vsel %vm637, %v636, 0
    %640 = vmatpush.msra.mxu0 0.0
    %641 = vmatpush.msra.mxu0 0.0
    %642 = vmatpush.msra.mxu0 0.0
    %643 = vmatpush.msra.mxu0 0.0
    %644 = vmatpush.msra.mxu0 0.0
    %645 = vmatpush.msra.mxu0 0.0
    %646 = vmatpush.msra.mxu0 0.0
    %647 = vmatpush.msra.mxu0 0.0
    %648 = vmatpush.msra.mxu0 %v422
    %649 = vmatpush.msra.mxu0 %v421
    %650 = vmatpush.msra.mxu0 %v420
    %651 = vmatpush.msra.mxu0 %v419
    %652 = vmatpush.msra.mxu0 %v418
    %653 = vmatpush.msra.mxu0 %v417
    %654 = vmatpush.msra.mxu0 %v416
    %655 = vmatpush.msra.mxu0 %v415
    %656 = vmatmul.f32.gmra.mxu0 %v638
    %v657 = vpop.f32.mrf.mxu0
    %v658 = vadd.f32 0.0, %v657
    %659 = vdwg.mxu0
    %v660 = vmax.f32 %v658, 0.0
    %v661 = vld [vmem:[%s2] sm:$0xf]
    %vm662 = vcmask 31744
    %v664 = vsel %vm662, %v660, 0
    %vm666 = vcmask 1043456
    %v668 = vsel %vm666, %v661, 0
    %670 = vmatpush.msra.mxu0 0.0
    %671 = vmatpush.msra.mxu0 0.0
    %672 = vmatpush.msra.mxu0 0.0
    %673 = vmatpush.msra.mxu0 0.0
    %674 = vmatpush.msra.mxu0 0.0
    %675 = vmatpush.msra.mxu0 0.0
    %676 = vmatpush.msra.mxu0 0.0
    %677 = vmatpush.msra.mxu0 0.0
    %678 = vmatpush.msra.mxu0 0.0
    %679 = vmatpush.msra.mxu0 0.0
    %680 = vmatpush.msra.mxu0 0.0
    %681 = vmatpush.msra.mxu0 0.0
    %682 = vmatpush.msra.mxu0 0.0
    %683 = vmatpush.msra.mxu0 0.0
    %684 = vmatpush.msra.mxu0 0.0
    %685 = vmatpush.msra.mxu0 %v668
    %686 = vmatmul.f32.gmra.mxu0 %v664
    %v687 = vpop.f32.mrf.mxu0
    %v688 = vadd.f32 0.0, %v687
    %689 = vdwg.mxu0
    %v690 = vxor.u32 %v688, 2147483648
    %v691 = vmul.f32 %v690, 1.442695
    %v692 = vpow.pop %v691
    %v693 = vadd.f32 %v692, 1.0
    %v694 = vrcp.pop %v693
    %v695 = vmul.f32 %v693, %v694
    %v696 = vsub.f32 1.0, %v695
    %v697 = vmul.f32 %v694, %v696
    %v698 = vadd.f32 %v694, %v697
    %vm699 = vweird.f32 %v693
    %vm700 = vweird.f32 %v694
    %vm701 = vmor %vm699, %vm700
    %v702 = vsel %vm701, %v694, %v698
    %v703 = vand.u32 2147483647, %v693
    %vm704 = vcmp.eq.f32.partialorder %v703, 8.507059e+37
    %v705 = vand.u32 %v693, 2147483648
    %v706 = vor.u32 1.1754944e-38, %v705
    %v707 = vsel %vm704, %v706, %v702
    %v708 = vmul.f32 1.0, %v707
    %v709 = vperm.slane %v708, 0
    %v710 = vlaneseq
    %v711 = vshrl.u32 %v710, 7
    %713 = vset.pattern.permute.xlu0 %v711
    %714 = vperm.xlu0 %713, %v709
    %v715 = vpop.permute.xlu0 %714
    %v716 = vlaneseq
    %v717 = vshrl.u32 %v716, 7
    %v718 = vadd.s32 %v717, 8
    %719 = vset.pattern.permute.xlu0 %v718
    %720 = vperm.xlu0 %719, %v709
    %v721 = vpop.permute.xlu0 %720
    %v722 = vlaneseq
    %v723 = vshrl.u32 %v722, 7
    %v724 = vadd.s32 %v723, 16
    %725 = vset.pattern.permute.xlu0 %v724
    %726 = vperm.xlu0 %725, %v709
    %v727 = vpop.permute.xlu0 %726
    %v728 = vlaneseq
    %v729 = vshrl.u32 %v728, 7
    %v730 = vadd.s32 %v729, 24
    %731 = vset.pattern.permute.xlu0 %v730
    %732 = vperm.xlu0 %731, %v709
    %v733 = vpop.permute.xlu0 %732
    %v734 = vlaneseq
    %v735 = vshrl.u32 %v734, 7
    %v736 = vadd.s32 %v735, 32
    %737 = vset.pattern.permute.xlu0 %v736
    %738 = vperm.xlu0 %737, %v709
    %v739 = vpop.permute.xlu0 %738
    %v740 = vlaneseq
    %v741 = vshrl.u32 %v740, 7
    %v742 = vadd.s32 %v741, 40
    %743 = vset.pattern.permute.xlu0 %v742
    %744 = vperm.xlu0 %743, %v709
    %v745 = vpop.permute.xlu0 %744
    %v746 = vlaneseq
    %v747 = vshrl.u32 %v746, 7
    %v748 = vadd.s32 %v747, 48
    %749 = vset.pattern.permute.xlu0 %v748
    %750 = vperm.xlu0 %749, %v709
    %v751 = vpop.permute.xlu0 %750
    %v752 = vlaneseq
    %v753 = vshrl.u32 %v752, 7
    %v754 = vadd.s32 %v753, 56
    %755 = vset.pattern.permute.xlu0 %v754
    %756 = vperm.xlu0 %755, %v709
    %v757 = vpop.permute.xlu0 %756
    %v758 = vperm.slane %v708, 1
    %v759 = vlaneseq
    %v760 = vshrl.u32 %v759, 7
    %762 = vset.pattern.permute.xlu0 %v760
    %763 = vperm.xlu0 %762, %v758
    %v764 = vpop.permute.xlu0 %763
    %v765 = vlaneseq
    %v766 = vshrl.u32 %v765, 7
    %v767 = vadd.s32 %v766, 8
    %768 = vset.pattern.permute.xlu0 %v767
    %769 = vperm.xlu0 %768, %v758
    %v770 = vpop.permute.xlu0 %769
    %v771 = vlaneseq
    %v772 = vshrl.u32 %v771, 7
    %v773 = vadd.s32 %v772, 16
    %774 = vset.pattern.permute.xlu0 %v773
    %775 = vperm.xlu0 %774, %v758
    %v776 = vpop.permute.xlu0 %775
    %v777 = vlaneseq
    %v778 = vshrl.u32 %v777, 7
    %v779 = vadd.s32 %v778, 24
    %780 = vset.pattern.permute.xlu0 %v779
    %781 = vperm.xlu0 %780, %v758
    %v782 = vpop.permute.xlu0 %781
    %v783 = vlaneseq
    %v784 = vshrl.u32 %v783, 7
    %v785 = vadd.s32 %v784, 32
    %786 = vset.pattern.permute.xlu0 %v785
    %787 = vperm.xlu0 %786, %v758
    %v788 = vpop.permute.xlu0 %787
    %v789 = vlaneseq
    %v790 = vshrl.u32 %v789, 7
    %v791 = vadd.s32 %v790, 40
    %792 = vset.pattern.permute.xlu0 %v791
    %793 = vperm.xlu0 %792, %v758
    %v794 = vpop.permute.xlu0 %793
    %v795 = vlaneseq
    %v796 = vshrl.u32 %v795, 7
    %v797 = vadd.s32 %v796, 48
    %798 = vset.pattern.permute.xlu0 %v797
    %799 = vperm.xlu0 %798, %v758
    %v800 = vpop.permute.xlu0 %799
    %v801 = vlaneseq
    %v802 = vshrl.u32 %v801, 7
    %v803 = vadd.s32 %v802, 56
    %804 = vset.pattern.permute.xlu0 %v803
    %805 = vperm.xlu0 %804, %v758
    %v806 = vpop.permute.xlu0 %805
    %v807 = vperm.slane %v708, 2
    %v808 = vlaneseq
    %v809 = vshrl.u32 %v808, 7
    %811 = vset.pattern.permute.xlu0 %v809
    %812 = vperm.xlu0 %811, %v807
    %v813 = vpop.permute.xlu0 %812
    %v814 = vlaneseq
    %v815 = vshrl.u32 %v814, 7
    %v816 = vadd.s32 %v815, 8
    %817 = vset.pattern.permute.xlu0 %v816
    %818 = vperm.xlu0 %817, %v807
    %v819 = vpop.permute.xlu0 %818
    %v820 = vlaneseq
    %v821 = vshrl.u32 %v820, 7
    %v822 = vadd.s32 %v821, 16
    %823 = vset.pattern.permute.xlu0 %v822
    %824 = vperm.xlu0 %823, %v807
    %v825 = vpop.permute.xlu0 %824
    %v826 = vlaneseq
    %v827 = vshrl.u32 %v826, 7
    %v828 = vadd.s32 %v827, 24
    %829 = vset.pattern.permute.xlu0 %v828
    %830 = vperm.xlu0 %829, %v807
    %v831 = vpop.permute.xlu0 %830
    %v832 = vlaneseq
    %v833 = vshrl.u32 %v832, 7
    %v834 = vadd.s32 %v833, 32
    %835 = vset.pattern.permute.xlu0 %v834
    %836 = vperm.xlu0 %835, %v807
    %v837 = vpop.permute.xlu0 %836
    %v838 = vlaneseq
    %v839 = vshrl.u32 %v838, 7
    %v840 = vadd.s32 %v839, 40
    %841 = vset.pattern.permute.xlu0 %v840
    %842 = vperm.xlu0 %841, %v807
    %v843 = vpop.permute.xlu0 %842
    %v844 = vlaneseq
    %v845 = vshrl.u32 %v844, 7
    %v846 = vadd.s32 %v845, 48
    %847 = vset.pattern.permute.xlu0 %v846
    %848 = vperm.xlu0 %847, %v807
    %v849 = vpop.permute.xlu0 %848
    %v850 = vlaneseq
    %v851 = vshrl.u32 %v850, 7
    %v852 = vadd.s32 %v851, 56
    %853 = vset.pattern.permute.xlu0 %v852
    %854 = vperm.xlu0 %853, %v807
    %v855 = vpop.permute.xlu0 %854
    %v856 = vperm.slane %v708, 3
    %v857 = vlaneseq
    %v858 = vshrl.u32 %v857, 7
    %860 = vset.pattern.permute.xlu0 %v858
    %861 = vperm.xlu0 %860, %v856
    %v862 = vpop.permute.xlu0 %861
    %v863 = vlaneseq
    %v864 = vshrl.u32 %v863, 7
    %v865 = vadd.s32 %v864, 8
    %866 = vset.pattern.permute.xlu0 %v865
    %867 = vperm.xlu0 %866, %v856
    %v868 = vpop.permute.xlu0 %867
    %v869 = vlaneseq
    %v870 = vshrl.u32 %v869, 7
    %v871 = vadd.s32 %v870, 16
    %872 = vset.pattern.permute.xlu0 %v871
    %873 = vperm.xlu0 %872, %v856
    %v874 = vpop.permute.xlu0 %873
    %v875 = vlaneseq
    %v876 = vshrl.u32 %v875, 7
    %v877 = vadd.s32 %v876, 24
    %878 = vset.pattern.permute.xlu0 %v877
    %879 = vperm.xlu0 %878, %v856
    %v880 = vpop.permute.xlu0 %879
    %v881 = vlaneseq
    %v882 = vshrl.u32 %v881, 7
    %v883 = vadd.s32 %v882, 32
    %884 = vset.pattern.permute.xlu0 %v883
    %885 = vperm.xlu0 %884, %v856
    %v886 = vpop.permute.xlu0 %885
    %v887 = vlaneseq
    %v888 = vshrl.u32 %v887, 7
    %v889 = vadd.s32 %v888, 40
    %890 = vset.pattern.permute.xlu0 %v889
    %891 = vperm.xlu0 %890, %v856
    %v892 = vpop.permute.xlu0 %891
    %v893 = vlaneseq
    %v894 = vshrl.u32 %v893, 7
    %v895 = vadd.s32 %v894, 48
    %896 = vset.pattern.permute.xlu0 %v895
    %897 = vperm.xlu0 %896, %v856
    %v898 = vpop.permute.xlu0 %897
    %v899 = vlaneseq
    %v900 = vshrl.u32 %v899, 7
    %v901 = vadd.s32 %v900, 56
    %902 = vset.pattern.permute.xlu0 %v901
    %903 = vperm.xlu0 %902, %v856
    %v904 = vpop.permute.xlu0 %903
    %v905 = vperm.slane %v708, 4
    %v906 = vlaneseq
    %v907 = vshrl.u32 %v906, 7
    %909 = vset.pattern.permute.xlu0 %v907
    %910 = vperm.xlu0 %909, %v905
    %v911 = vpop.permute.xlu0 %910
    %v912 = vlaneseq
    %v913 = vshrl.u32 %v912, 7
    %v914 = vadd.s32 %v913, 8
    %915 = vset.pattern.permute.xlu0 %v914
    %916 = vperm.xlu0 %915, %v905
    %v917 = vpop.permute.xlu0 %916
    %v918 = vlaneseq
    %v919 = vshrl.u32 %v918, 7
    %v920 = vadd.s32 %v919, 16
    %921 = vset.pattern.permute.xlu0 %v920
    %922 = vperm.xlu0 %921, %v905
    %v923 = vpop.permute.xlu0 %922
    %v924 = vlaneseq
    %v925 = vshrl.u32 %v924, 7
    %v926 = vadd.s32 %v925, 24
    %927 = vset.pattern.permute.xlu0 %v926
    %928 = vperm.xlu0 %927, %v905
    %v929 = vpop.permute.xlu0 %928
    %v930 = vlaneseq
    %v931 = vshrl.u32 %v930, 7
    %v932 = vadd.s32 %v931, 32
    %933 = vset.pattern.permute.xlu0 %v932
    %934 = vperm.xlu0 %933, %v905
    %v935 = vpop.permute.xlu0 %934
    %v936 = vlaneseq
    %v937 = vshrl.u32 %v936, 7
    %v938 = vadd.s32 %v937, 40
    %939 = vset.pattern.permute.xlu0 %v938
    %940 = vperm.xlu0 %939, %v905
    %v941 = vpop.permute.xlu0 %940
    %v942 = vlaneseq
    %v943 = vshrl.u32 %v942, 7
    %v944 = vadd.s32 %v943, 48
    %945 = vset.pattern.permute.xlu0 %v944
    %946 = vperm.xlu0 %945, %v905
    %v947 = vpop.permute.xlu0 %946
    %v948 = vlaneseq
    %v949 = vshrl.u32 %v948, 7
    %v950 = vadd.s32 %v949, 56
    %951 = vset.pattern.permute.xlu0 %v950
    %952 = vperm.xlu0 %951, %v905
    %v953 = vpop.permute.xlu0 %952
    %v954 = vperm.slane %v708, 5
    %v955 = vlaneseq
    %v956 = vshrl.u32 %v955, 7
    %958 = vset.pattern.permute.xlu0 %v956
    %959 = vperm.xlu0 %958, %v954
    %v960 = vpop.permute.xlu0 %959
    %v961 = vlaneseq
    %v962 = vshrl.u32 %v961, 7
    %v963 = vadd.s32 %v962, 8
    %964 = vset.pattern.permute.xlu0 %v963
    %965 = vperm.xlu0 %964, %v954
    %v966 = vpop.permute.xlu0 %965
    %v967 = vlaneseq
    %v968 = vshrl.u32 %v967, 7
    %v969 = vadd.s32 %v968, 16
    %970 = vset.pattern.permute.xlu0 %v969
    %971 = vperm.xlu0 %970, %v954
    %v972 = vpop.permute.xlu0 %971
    %v973 = vlaneseq
    %v974 = vshrl.u32 %v973, 7
    %v975 = vadd.s32 %v974, 24
    %976 = vset.pattern.permute.xlu0 %v975
    %977 = vperm.xlu0 %976, %v954
    %v978 = vpop.permute.xlu0 %977
    %v979 = vlaneseq
    %v980 = vshrl.u32 %v979, 7
    %v981 = vadd.s32 %v980, 32
    %982 = vset.pattern.permute.xlu0 %v981
    %983 = vperm.xlu0 %982, %v954
    %v984 = vpop.permute.xlu0 %983
    %v985 = vlaneseq
    %v986 = vshrl.u32 %v985, 7
    %v987 = vadd.s32 %v986, 40
    %988 = vset.pattern.permute.xlu0 %v987
    %989 = vperm.xlu0 %988, %v954
    %v990 = vpop.permute.xlu0 %989
    %v991 = vlaneseq
    %v992 = vshrl.u32 %v991, 7
    %v993 = vadd.s32 %v992, 48
    %994 = vset.pattern.permute.xlu0 %v993
    %995 = vperm.xlu0 %994, %v954
    %v996 = vpop.permute.xlu0 %995
    %v997 = vlaneseq
    %v998 = vshrl.u32 %v997, 7
    %v999 = vadd.s32 %v998, 56
    %1000 = vset.pattern.permute.xlu0 %v999
    %1001 = vperm.xlu0 %1000, %v954
    %v1002 = vpop.permute.xlu0 %1001
    %v1003 = vperm.slane %v708, 6
    %v1004 = vlaneseq
    %v1005 = vshrl.u32 %v1004, 7
    %1007 = vset.pattern.permute.xlu0 %v1005
    %1008 = vperm.xlu0 %1007, %v1003
    %v1009 = vpop.permute.xlu0 %1008
    %v1010 = vlaneseq
    %v1011 = vshrl.u32 %v1010, 7
    %v1012 = vadd.s32 %v1011, 8
    %1013 = vset.pattern.permute.xlu0 %v1012
    %1014 = vperm.xlu0 %1013, %v1003
    %v1015 = vpop.permute.xlu0 %1014
    %v1016 = vlaneseq
    %v1017 = vshrl.u32 %v1016, 7
    %v1018 = vadd.s32 %v1017, 16
    %1019 = vset.pattern.permute.xlu0 %v1018
    %1020 = vperm.xlu0 %1019, %v1003
    %v1021 = vpop.permute.xlu0 %1020
    %v1022 = vlaneseq
    %v1023 = vshrl.u32 %v1022, 7
    %v1024 = vadd.s32 %v1023, 24
    %1025 = vset.pattern.permute.xlu0 %v1024
    %1026 = vperm.xlu0 %1025, %v1003
    %v1027 = vpop.permute.xlu0 %1026
    %v1028 = vlaneseq
    %v1029 = vshrl.u32 %v1028, 7
    %v1030 = vadd.s32 %v1029, 32
    %1031 = vset.pattern.permute.xlu0 %v1030
    %1032 = vperm.xlu0 %1031, %v1003
    %v1033 = vpop.permute.xlu0 %1032
    %v1034 = vlaneseq
    %v1035 = vshrl.u32 %v1034, 7
    %v1036 = vadd.s32 %v1035, 40
    %1037 = vset.pattern.permute.xlu0 %v1036
    %1038 = vperm.xlu0 %1037, %v1003
    %v1039 = vpop.permute.xlu0 %1038
    %v1040 = vlaneseq
    %v1041 = vshrl.u32 %v1040, 7
    %v1042 = vadd.s32 %v1041, 48
    %1043 = vset.pattern.permute.xlu0 %v1042
    %1044 = vperm.xlu0 %1043, %v1003
    %v1045 = vpop.permute.xlu0 %1044
    %v1046 = vlaneseq
    %v1047 = vshrl.u32 %v1046, 7
    %v1048 = vadd.s32 %v1047, 56
    %1049 = vset.pattern.permute.xlu0 %v1048
    %1050 = vperm.xlu0 %1049, %v1003
    %v1051 = vpop.permute.xlu0 %1050
    %v1052 = vperm.slane %v708, 7
    %v1053 = vlaneseq
    %v1054 = vshrl.u32 %v1053, 7
    %1056 = vset.pattern.permute.xlu0 %v1054
    %1057 = vperm.xlu0 %1056, %v1052
    %v1058 = vpop.permute.xlu0 %1057
    %v1059 = vlaneseq
    %v1060 = vshrl.u32 %v1059, 7
    %v1061 = vadd.s32 %v1060, 8
    %1062 = vset.pattern.permute.xlu0 %v1061
    %1063 = vperm.xlu0 %1062, %v1052
    %v1064 = vpop.permute.xlu0 %1063
    %v1065 = vlaneseq
    %v1066 = vshrl.u32 %v1065, 7
    %v1067 = vadd.s32 %v1066, 16
    %1068 = vset.pattern.permute.xlu0 %v1067
    %1069 = vperm.xlu0 %1068, %v1052
    %v1070 = vpop.permute.xlu0 %1069
    %v1071 = vlaneseq
    %v1072 = vshrl.u32 %v1071, 7
    %v1073 = vadd.s32 %v1072, 24
    %1074 = vset.pattern.permute.xlu0 %v1073
    %1075 = vperm.xlu0 %1074, %v1052
    %v1076 = vpop.permute.xlu0 %1075
    %v1077 = vlaneseq
    %v1078 = vshrl.u32 %v1077, 7
    %v1079 = vadd.s32 %v1078, 32
    %1080 = vset.pattern.permute.xlu0 %v1079
    %1081 = vperm.xlu0 %1080, %v1052
    %v1082 = vpop.permute.xlu0 %1081
    %v1083 = vlaneseq
    %v1084 = vshrl.u32 %v1083, 7
    %v1085 = vadd.s32 %v1084, 40
    %1086 = vset.pattern.permute.xlu0 %v1085
    %1087 = vperm.xlu0 %1086, %v1052
    %v1088 = vpop.permute.xlu0 %1087
    %v1089 = vlaneseq
    %v1090 = vshrl.u32 %v1089, 7
    %v1091 = vadd.s32 %v1090, 48
    %1092 = vset.pattern.permute.xlu0 %v1091
    %1093 = vperm.xlu0 %1092, %v1052
    %v1094 = vpop.permute.xlu0 %1093
    %v1095 = vlaneseq
    %v1096 = vshrl.u32 %v1095, 7
    %v1097 = vadd.s32 %v1096, 56
    %1098 = vset.pattern.permute.xlu0 %v1097
    %1099 = vperm.xlu0 %1098, %v1052
    %v1100 = vpop.permute.xlu0 %1099
    %v1101 = vmul.f32 %v31, %v715
    %v1102 = vmul.f32 %v32, %v715
    %v1103 = vmul.f32 %v33, %v721
    %v1104 = vmul.f32 %v34, %v721
    %v1105 = vmul.f32 %v35, %v727
    %v1106 = vmul.f32 %v36, %v727
    %v1107 = vmul.f32 %v37, %v733
    %v1108 = vmul.f32 %v38, %v733
    %v1109 = vmul.f32 %v39, %v739
    %v1110 = vmul.f32 %v40, %v739
    %v1111 = vmul.f32 %v41, %v745
    %v1112 = vmul.f32 %v42, %v745
    %v1113 = vmul.f32 %v43, %v751
    %v1114 = vmul.f32 %v44, %v751
    %v1115 = vmul.f32 %v45, %v757
    %v1116 = vmul.f32 %v46, %v757
    %v1117 = vmul.f32 %v47, %v764
    %v1118 = vmul.f32 %v48, %v764
    %v1119 = vmul.f32 %v49, %v770
    %v1120 = vmul.f32 %v50, %v770
    %v1121 = vmul.f32 %v51, %v776
    %v1122 = vmul.f32 %v52, %v776
    %v1123 = vmul.f32 %v53, %v782
    %v1124 = vmul.f32 %v54, %v782
    %v1125 = vmul.f32 %v55, %v788
    %v1126 = vmul.f32 %v56, %v788
    %v1127 = vmul.f32 %v57, %v794
    %v1128 = vmul.f32 %v58, %v794
    %v1129 = vmul.f32 %v59, %v800
    %v1130 = vmul.f32 %v60, %v800
    %v1131 = vmul.f32 %v61, %v806
    %v1132 = vmul.f32 %v62, %v806
    %v1133 = vmul.f32 %v63, %v813
    %v1134 = vmul.f32 %v64, %v813
    %v1135 = vmul.f32 %v65, %v819
    %v1136 = vmul.f32 %v66, %v819
    %v1137 = vmul.f32 %v67, %v825
    %v1138 = vmul.f32 %v68, %v825
    %v1139 = vmul.f32 %v69, %v831
    %v1140 = vmul.f32 %v70, %v831
    %v1141 = vmul.f32 %v71, %v837
    %v1142 = vmul.f32 %v72, %v837
    %v1143 = vmul.f32 %v73, %v843
    %v1144 = vmul.f32 %v74, %v843
    %v1145 = vmul.f32 %v75, %v849
    %v1146 = vmul.f32 %v76, %v849
    %v1147 = vmul.f32 %v77, %v855
    %v1148 = vmul.f32 %v78, %v855
    %v1149 = vmul.f32 %v79, %v862
    %v1150 = vmul.f32 %v80, %v862
    %v1151 = vmul.f32 %v81, %v868
    %v1152 = vmul.f32 %v82, %v868
    %v1153 = vmul.f32 %v83, %v874
    %v1154 = vmul.f32 %v84, %v874
    %v1155 = vmul.f32 %v85, %v880
    %v1156 = vmul.f32 %v86, %v880
    %v1157 = vmul.f32 %v87, %v886
    %v1158 = vmul.f32 %v88, %v886
    %v1159 = vmul.f32 %v89, %v892
    %v1160 = vmul.f32 %v90, %v892
    %v1161 = vmul.f32 %v91, %v898
    %v1162 = vmul.f32 %v92, %v898
    %v1163 = vmul.f32 %v93, %v904
    %v1164 = vmul.f32 %v94, %v904
    %v1165 = vmul.f32 %v95, %v911
    %v1166 = vmul.f32 %v96, %v911
    %v1167 = vmul.f32 %v97, %v917
    %v1168 = vmul.f32 %v98, %v917
    %v1169 = vmul.f32 %v99, %v923
    %v1170 = vmul.f32 %v100, %v923
    %v1171 = vmul.f32 %v101, %v929
    %v1172 = vmul.f32 %v102, %v929
    %v1173 = vmul.f32 %v103, %v935
    %v1174 = vmul.f32 %v104, %v935
    %v1175 = vmul.f32 %v105, %v941
    %v1176 = vmul.f32 %v106, %v941
    %v1177 = vmul.f32 %v107, %v947
    %v1178 = vmul.f32 %v108, %v947
    %v1179 = vmul.f32 %v109, %v953
    %v1180 = vmul.f32 %v110, %v953
    %v1181 = vmul.f32 %v111, %v960
    %v1182 = vmul.f32 %v112, %v960
    %v1183 = vmul.f32 %v113, %v966
    %v1184 = vmul.f32 %v114, %v966
    %v1185 = vmul.f32 %v115, %v972
    %v1186 = vmul.f32 %v116, %v972
    %v1187 = vmul.f32 %v117, %v978
    %v1188 = vmul.f32 %v118, %v978
    %v1189 = vmul.f32 %v119, %v984
    %v1190 = vmul.f32 %v120, %v984
    %v1191 = vmul.f32 %v121, %v990
    %v1192 = vmul.f32 %v122, %v990
    %v1193 = vmul.f32 %v123, %v996
    %v1194 = vmul.f32 %v124, %v996
    %v1195 = vmul.f32 %v125, %v1002
    %v1196 = vmul.f32 %v126, %v1002
    %v1197 = vmul.f32 %v127, %v1009
    %v1198 = vmul.f32 %v128, %v1009
    %v1199 = vmul.f32 %v129, %v1015
    %v1200 = vmul.f32 %v130, %v1015
    %v1201 = vmul.f32 %v131, %v1021
    %v1202 = vmul.f32 %v132, %v1021
    %v1203 = vmul.f32 %v133, %v1027
    %v1204 = vmul.f32 %v134, %v1027
    %v1205 = vmul.f32 %v135, %v1033
    %v1206 = vmul.f32 %v136, %v1033
    %v1207 = vmul.f32 %v137, %v1039
    %v1208 = vmul.f32 %v138, %v1039
    %v1209 = vmul.f32 %v139, %v1045
    %v1210 = vmul.f32 %v140, %v1045
    %v1211 = vmul.f32 %v141, %v1051
    %v1212 = vmul.f32 %v142, %v1051
    %v1213 = vmul.f32 %v143, %v1058
    %v1214 = vmul.f32 %v144, %v1058
    %v1215 = vmul.f32 %v145, %v1064
    %v1216 = vmul.f32 %v146, %v1064
    %v1217 = vmul.f32 %v147, %v1070
    %v1218 = vmul.f32 %v148, %v1070
    %v1219 = vmul.f32 %v149, %v1076
    %v1220 = vmul.f32 %v150, %v1076
    %v1221 = vmul.f32 %v151, %v1082
    %v1222 = vmul.f32 %v152, %v1082
    %v1223 = vmul.f32 %v153, %v1088
    %v1224 = vmul.f32 %v154, %v1088
    %v1225 = vmul.f32 %v155, %v1094
    %v1226 = vmul.f32 %v156, %v1094
    %v1227 = vmul.f32 %v157, %v1100
    %v1228 = vmul.f32 %v158, %v1100
    %1229 = vst [vmem:[#allocation5] sm:$0xff] %v1101
    %1230 = vst [vmem:[#allocation5 + $0x8] sm:$0xff] %v1102
    %1231 = vst [vmem:[#allocation5 + $0x10] sm:$0xff] %v1103
    %1232 = vst [vmem:[#allocation5 + $0x18] sm:$0xff] %v1104
    %1233 = vst [vmem:[#allocation5 + $0x20] sm:$0xff] %v1105
    %1234 = vst [vmem:[#allocation5 + $0x28] sm:$0xff] %v1106
    %1235 = vst [vmem:[#allocation5 + $0x30] sm:$0xff] %v1107
    %1236 = vst [vmem:[#allocation5 + $0x38] sm:$0xff] %v1108
    %1237 = vst [vmem:[#allocation5 + $0x40] sm:$0xff] %v1109
    %1238 = vst [vmem:[#allocation5 + $0x48] sm:$0xff] %v1110
    %1239 = vst [vmem:[#allocation5 + $0x50] sm:$0xff] %v1111
    %1240 = vst [vmem:[#allocation5 + $0x58] sm:$0xff] %v1112
    %1241 = vst [vmem:[#allocation5 + $0x60] sm:$0xff] %v1113
    %1242 = vst [vmem:[#allocation5 + $0x68] sm:$0xff] %v1114
    %1243 = vst [vmem:[#allocation5 + $0x70] sm:$0xff] %v1115
    %1244 = vst [vmem:[#allocation5 + $0x78] sm:$0xff] %v1116
    %1245 = vst [vmem:[#allocation5 + $0x80] sm:$0xff] %v1117
    %1246 = vst [vmem:[#allocation5 + $0x88] sm:$0xff] %v1118
    %1247 = vst [vmem:[#allocation5 + $0x90] sm:$0xff] %v1119
    %1248 = vst [vmem:[#allocation5 + $0x98] sm:$0xff] %v1120
    %1249 = vst [vmem:[#allocation5 + $0xa0] sm:$0xff] %v1121
    %1250 = vst [vmem:[#allocation5 + $0xa8] sm:$0xff] %v1122
    %1251 = vst [vmem:[#allocation5 + $0xb0] sm:$0xff] %v1123
    %1252 = vst [vmem:[#allocation5 + $0xb8] sm:$0xff] %v1124
    %1253 = vst [vmem:[#allocation5 + $0xc0] sm:$0xff] %v1125
    %1254 = vst [vmem:[#allocation5 + $0xc8] sm:$0xff] %v1126
    %1255 = vst [vmem:[#allocation5 + $0xd0] sm:$0xff] %v1127
    %1256 = vst [vmem:[#allocation5 + $0xd8] sm:$0xff] %v1128
    %1257 = vst [vmem:[#allocation5 + $0xe0] sm:$0xff] %v1129
    %1258 = vst [vmem:[#allocation5 + $0xe8] sm:$0xff] %v1130
    %1259 = vst [vmem:[#allocation5 + $0xf0] sm:$0xff] %v1131
    %1260 = vst [vmem:[#allocation5 + $0xf8] sm:$0xff] %v1132
    %1261 = vst [vmem:[#allocation5 + $0x100] sm:$0xff] %v1133
    %1262 = vst [vmem:[#allocation5 + $0x108] sm:$0xff] %v1134
    %1263 = vst [vmem:[#allocation5 + $0x110] sm:$0xff] %v1135
    %1264 = vst [vmem:[#allocation5 + $0x118] sm:$0xff] %v1136
    %1265 = vst [vmem:[#allocation5 + $0x120] sm:$0xff] %v1137
    %1266 = vst [vmem:[#allocation5 + $0x128] sm:$0xff] %v1138
    %1267 = vst [vmem:[#allocation5 + $0x130] sm:$0xff] %v1139
    %1268 = vst [vmem:[#allocation5 + $0x138] sm:$0xff] %v1140
    %1269 = vst [vmem:[#allocation5 + $0x140] sm:$0xff] %v1141
    %1270 = vst [vmem:[#allocation5 + $0x148] sm:$0xff] %v1142
    %1271 = vst [vmem:[#allocation5 + $0x150] sm:$0xff] %v1143
    %1272 = vst [vmem:[#allocation5 + $0x158] sm:$0xff] %v1144
    %1273 = vst [vmem:[#allocation5 + $0x160] sm:$0xff] %v1145
    %1274 = vst [vmem:[#allocation5 + $0x168] sm:$0xff] %v1146
    %1275 = vst [vmem:[#allocation5 + $0x170] sm:$0xff] %v1147
    %1276 = vst [vmem:[#allocation5 + $0x178] sm:$0xff] %v1148
    %1277 = vst [vmem:[#allocation5 + $0x180] sm:$0xff] %v1149
    %1278 = vst [vmem:[#allocation5 + $0x188] sm:$0xff] %v1150
    %1279 = vst [vmem:[#allocation5 + $0x190] sm:$0xff] %v1151
    %1280 = vst [vmem:[#allocation5 + $0x198] sm:$0xff] %v1152
    %1281 = vst [vmem:[#allocation5 + $0x1a0] sm:$0xff] %v1153
    %1282 = vst [vmem:[#allocation5 + $0x1a8] sm:$0xff] %v1154
    %1283 = vst [vmem:[#allocation5 + $0x1b0] sm:$0xff] %v1155
    %1284 = vst [vmem:[#allocation5 + $0x1b8] sm:$0xff] %v1156
    %1285 = vst [vmem:[#allocation5 + $0x1c0] sm:$0xff] %v1157
    %1286 = vst [vmem:[#allocation5 + $0x1c8] sm:$0xff] %v1158
    %1287 = vst [vmem:[#allocation5 + $0x1d0] sm:$0xff] %v1159
    %1288 = vst [vmem:[#allocation5 + $0x1d8] sm:$0xff] %v1160
    %1289 = vst [vmem:[#allocation5 + $0x1e0] sm:$0xff] %v1161
    %1290 = vst [vmem:[#allocation5 + $0x1e8] sm:$0xff] %v1162
    %1291 = vst [vmem:[#allocation5 + $0x1f0] sm:$0xff] %v1163
    %1292 = vst [vmem:[#allocation5 + $0x1f8] sm:$0xff] %v1164
    %1293 = vst [vmem:[#allocation5 + $0x200] sm:$0xff] %v1165
    %1294 = vst [vmem:[#allocation5 + $0x208] sm:$0xff] %v1166
    %1295 = vst [vmem:[#allocation5 + $0x210] sm:$0xff] %v1167
    %1296 = vst [vmem:[#allocation5 + $0x218] sm:$0xff] %v1168
    %1297 = vst [vmem:[#allocation5 + $0x220] sm:$0xff] %v1169
    %1298 = vst [vmem:[#allocation5 + $0x228] sm:$0xff] %v1170
    %1299 = vst [vmem:[#allocation5 + $0x230] sm:$0xff] %v1171
    %1300 = vst [vmem:[#allocation5 + $0x238] sm:$0xff] %v1172
    %1301 = vst [vmem:[#allocation5 + $0x240] sm:$0xff] %v1173
    %1302 = vst [vmem:[#allocation5 + $0x248] sm:$0xff] %v1174
    %1303 = vst [vmem:[#allocation5 + $0x250] sm:$0xff] %v1175
    %1304 = vst [vmem:[#allocation5 + $0x258] sm:$0xff] %v1176
    %1305 = vst [vmem:[#allocation5 + $0x260] sm:$0xff] %v1177
    %1306 = vst [vmem:[#allocation5 + $0x268] sm:$0xff] %v1178
    %1307 = vst [vmem:[#allocation5 + $0x270] sm:$0xff] %v1179
    %1308 = vst [vmem:[#allocation5 + $0x278] sm:$0xff] %v1180
    %1309 = vst [vmem:[#allocation5 + $0x280] sm:$0xff] %v1181
    %1310 = vst [vmem:[#allocation5 + $0x288] sm:$0xff] %v1182
    %1311 = vst [vmem:[#allocation5 + $0x290] sm:$0xff] %v1183
    %1312 = vst [vmem:[#allocation5 + $0x298] sm:$0xff] %v1184
    %1313 = vst [vmem:[#allocation5 + $0x2a0] sm:$0xff] %v1185
    %1314 = vst [vmem:[#allocation5 + $0x2a8] sm:$0xff] %v1186
    %1315 = vst [vmem:[#allocation5 + $0x2b0] sm:$0xff] %v1187
    %1316 = vst [vmem:[#allocation5 + $0x2b8] sm:$0xff] %v1188
    %1317 = vst [vmem:[#allocation5 + $0x2c0] sm:$0xff] %v1189
    %1318 = vst [vmem:[#allocation5 + $0x2c8] sm:$0xff] %v1190
    %1319 = vst [vmem:[#allocation5 + $0x2d0] sm:$0xff] %v1191
    %1320 = vst [vmem:[#allocation5 + $0x2d8] sm:$0xff] %v1192
    %1321 = vst [vmem:[#allocation5 + $0x2e0] sm:$0xff] %v1193
    %1322 = vst [vmem:[#allocation5 + $0x2e8] sm:$0xff] %v1194
    %1323 = vst [vmem:[#allocation5 + $0x2f0] sm:$0xff] %v1195
    %1324 = vst [vmem:[#allocation5 + $0x2f8] sm:$0xff] %v1196
    %1325 = vst [vmem:[#allocation5 + $0x300] sm:$0xff] %v1197
    %1326 = vst [vmem:[#allocation5 + $0x308] sm:$0xff] %v1198
    %1327 = vst [vmem:[#allocation5 + $0x310] sm:$0xff] %v1199
    %1328 = vst [vmem:[#allocation5 + $0x318] sm:$0xff] %v1200
    %1329 = vst [vmem:[#allocation5 + $0x320] sm:$0xff] %v1201
    %1330 = vst [vmem:[#allocation5 + $0x328] sm:$0xff] %v1202
    %1331 = vst [vmem:[#allocation5 + $0x330] sm:$0xff] %v1203
    %1332 = vst [vmem:[#allocation5 + $0x338] sm:$0xff] %v1204
    %1333 = vst [vmem:[#allocation5 + $0x340] sm:$0xff] %v1205
    %1334 = vst [vmem:[#allocation5 + $0x348] sm:$0xff] %v1206
    %1335 = vst [vmem:[#allocation5 + $0x350] sm:$0xff] %v1207
    %1336 = vst [vmem:[#allocation5 + $0x358] sm:$0xff] %v1208
    %1337 = vst [vmem:[#allocation5 + $0x360] sm:$0xff] %v1209
    %1338 = vst [vmem:[#allocation5 + $0x368] sm:$0xff] %v1210
    %1339 = vst [vmem:[#allocation5 + $0x370] sm:$0xff] %v1211
    %1340 = vst [vmem:[#allocation5 + $0x378] sm:$0xff] %v1212
    %1341 = vst [vmem:[#allocation5 + $0x380] sm:$0xff] %v1213
    %1342 = vst [vmem:[#allocation5 + $0x388] sm:$0xff] %v1214
    %1343 = vst [vmem:[#allocation5 + $0x390] sm:$0xff] %v1215
    %1344 = vst [vmem:[#allocation5 + $0x398] sm:$0xff] %v1216
    %1345 = vst [vmem:[#allocation5 + $0x3a0] sm:$0xff] %v1217
    %1346 = vst [vmem:[#allocation5 + $0x3a8] sm:$0xff] %v1218
    %1347 = vst [vmem:[#allocation5 + $0x3b0] sm:$0xff] %v1219
    %1348 = vst [vmem:[#allocation5 + $0x3b8] sm:$0xff] %v1220
    %1349 = vst [vmem:[#allocation5 + $0x3c0] sm:$0xff] %v1221
    %1350 = vst [vmem:[#allocation5 + $0x3c8] sm:$0xff] %v1222
    %1351 = vst [vmem:[#allocation5 + $0x3d0] sm:$0xff] %v1223
    %1352 = vst [vmem:[#allocation5 + $0x3d8] sm:$0xff] %v1224
    %1353 = vst [vmem:[#allocation5 + $0x3e0] sm:$0xff] %v1225
    %1354 = vst [vmem:[#allocation5 + $0x3e8] sm:$0xff] %v1226
    %1355 = vst [vmem:[#allocation5 + $0x3f0] sm:$0xff] %v1227
    %1356 = vst [vmem:[#allocation5 + $0x3f8] sm:$0xff] %v1228
    // Predicated region
    $region18: #{tpu_custom_call.1} parent=1 // pred_check
      _
    $region19: #{tpu_custom_call.1} parent=1 // pred_check_branch
      %1358 = sbr.rel (0) target = $region21
    $region20: #{tpu_custom_call.1} parent=1 // pred_region
      %1360 = vsyncadd [#allocation4], 0
      %s1361 = sshll.u32 [#allocation5], 4
      %s1362 = int_to_ptr.vmem [resolvable:$true] %s1361
      %s1363 = sshll.u32 %s3, 4
      %s1364 = int_to_ptr.hbm [resolvable:$true] %s1363
      %1369 = dma.vmem_to_hbm [thread:$0]  %s1362, 16384, %s1364, [#allocation4], 256, 256, 16
    $region21: #{tpu_custom_call.1} parent=1 // pred_fallthru
      _
    // Predicated region
    $region22: #{tpu_custom_call.1} parent=1 // pred_check
      _
    $region23: #{tpu_custom_call.1} parent=1 // pred_check_branch
      %1371 = sbr.rel (0) target = $region25
    $region24: #{tpu_custom_call.1} parent=1 // pred_region
      %1373 = dma.done [#allocation4], 16384
    $region25: #{tpu_custom_call.1} parent=1 // pred_fallthru
      _
    %1374 = vsyncpa [#allocation3], 1
    %1375 = vsyncpa [#allocation4], 1

</llo_original>
